<compile_context>
chip_gen: v7x
topology: tpu7x:2x2x1
jax: 0.10.0
libtpu: 0.0.40
codegen_flags: <defaults>
</compile_context>

<pallas_src>
import jax
import jax.numpy as jnp
import numpy as np
from jax.experimental import pallas as pl
from jax.experimental.pallas import tpu as pltpu

# nn.Linear(10,50),(50,100),(100,200),(200,100),(100,50),(50,1)
DIMS = [10, 50, 100, 200, 100, 50, 1]


def _round_up(n, m):
    return ((n + m - 1) // m) * m


def _pad128(n):
    return max(128, _round_up(n, 128))


# Input feature dim stays unpadded (block last-dim == full array dim is legal and
# avoids ~13x extra HBM traffic for x); hidden dims are lane-padded.  The 1-wide
# output is NOT padded anymore (handled by the VPU final layer).
PDIMS = [DIMS[0]] + [_pad128(d) for d in DIMS[1:-1]]   # [10, 128, 128, 256, 128, 128]


def _make_mlp_kernel(compute_dtype):
    def mlp_kernel(x_ref,
                   w1, b1, w2, b2, w3, b3, w4, b4, w5, b5, w6, b6,
                   o_ref):
        """Fused forward for one (TB, 10) batch tile; weights are VMEM-resident."""
        h = x_ref[...]

        def linear_relu(h, w_ref, b_ref):
            # MXU matmul; optionally bf16 inputs with f32 accumulation.
            y = jnp.dot(h.astype(compute_dtype), w_ref[...].astype(compute_dtype),
                        preferred_element_type=jnp.float32) + b_ref[...]
            return jnp.maximum(y, 0.0)

        h = linear_relu(h, w1, b1)
        h = linear_relu(h, w2, b2)
        h = linear_relu(h, w3, b3)
        h = linear_relu(h, w4, b4)
        h = linear_relu(h, w5, b5)
        # Final layer (out dim 1): VPU broadcast-mul + lane reduction instead of a
        # (TB,128)@(128,128) MXU matmul with 127 dead columns; stores a true (TB,1)
        # block (4 B/row instead of 512 B/row of HBM writes).  Kept in f32.
        o_ref[...] = jnp.sum(h * w6[...], axis=-1, keepdims=True) + b6[...]

    return mlp_kernel


def init_params(key):
    """PyTorch-default-style init U(-1/sqrt(fan_in), 1/sqrt(fan_in)) at TRUE dims.

    Weights stored as (in, out); biases as (1, out).
    """
    params = []
    for i in range(len(DIMS) - 1):
        fan_in, fan_out = DIMS[i], DIMS[i + 1]
        key, kw, kb = jax.random.split(key, 3)
        bound = 1.0 / np.sqrt(fan_in)
        w = jax.random.uniform(kw, (fan_in, fan_out), jnp.float32, -bound, bound)
        b = jax.random.uniform(kb, (1, fan_out), jnp.float32, -bound, bound)
        params.extend([w, b])
    return params


def pad_params(params):
    """Zero-pad weights/biases to lane-dense dims; final layer becomes a row vector."""
    padded = []
    n_layers = len(DIMS) - 1
    for li in range(n_layers):
        w, b = params[2 * li], params[2 * li + 1]
        if li < n_layers - 1:
            in_p, out_p = PDIMS[li], PDIMS[li + 1]
            w = jnp.pad(w, ((0, in_p - w.shape[0]), (0, out_p - w.shape[1])))
            b = jnp.pad(b, ((0, 0), (0, out_p - b.shape[1])))
        else:
            # (50, 1) -> (1, 128) row vector for the VPU mul + lane-reduce path.
            w_row = w.T
            w = jnp.pad(w_row, ((0, 0), (0, PDIMS[li] - w_row.shape[1])))
            # b stays (1, 1).
        padded.extend([w, b])
    return padded


def simple_mlp_forward(x, padded_params, *, tb_cap=2048, compute_dtype=jnp.float32):
    B = x.shape[0]
    in_dim = PDIMS[0]

    # Batch tiling: >=8 sublane rows; force >=2 grid steps (>=4 for bigger batches)
    # so v7x's 2 TensorCores both get work and input/output DMAs pipeline; cap at
    # tb_cap rows to amortize per-step overhead while staying well inside VMEM.
    B8 = _round_up(max(B, 8), 8)
    if B8 >= 32:
        min_steps = 4
    elif B8 >= 16:
        min_steps = 2
    else:
        min_steps = 1
    TB = min(tb_cap, _round_up(-(-B8 // min_steps), 8))
    B_pad = _round_up(B8, TB)
    if B_pad != B:
        x = jnp.pad(x, ((0, B_pad - B), (0, 0)))
    grid = (B_pad // TB,)

    x_spec = pl.BlockSpec((TB, in_dim), lambda i: (i, 0))
    out_spec = pl.BlockSpec((TB, 1), lambda i: (i, 0))
    # Weights/biases: full-array blocks, constant index_map -> VMEM-resident.
    param_specs = [pl.BlockSpec(p.shape, lambda i: (0, 0)) for p in padded_params]

    mxu_flops = 2 * B_pad * sum(PDIMS[j] * PDIMS[j + 1] for j in range(len(PDIMS) - 1))
    vpu_flops = 2 * B_pad * PDIMS[-1]
    bytes_accessed = (sum(int(np.prod(p.shape)) for p in padded_params) * 4
                      + B_pad * (in_dim + 1) * 4)

    out = pl.pallas_call(
        _make_mlp_kernel(compute_dtype),
        out_shape=jax.ShapeDtypeStruct((B_pad, 1), jnp.float32),
        grid=grid,
        in_specs=[x_spec] + param_specs,
        out_specs=out_spec,
        compiler_params=pltpu.CompilerParams(
            dimension_semantics=("parallel",)),
        cost_estimate=pl.CostEstimate(
            flops=mxu_flops + vpu_flops, transcendentals=0,
            bytes_accessed=bytes_accessed),
    )(x, *padded_params)

    # Only batch padding to strip now (output lanes are already exact).
    return out[:B]


def mlp_reference(x, params):
    h = x
    for i in range(0, len(params), 2):
        w, b = params[i], params[i + 1]
        h = h @ w + b
        if i < len(params) - 2:
            h = jnp.maximum(h, 0.0)
    return h


if __name__ == "__main__":
    key = jax.random.PRNGKey(0)
    key, kx = jax.random.split(key)

    params = init_params(key)
    padded_params = pad_params(params)

    # Small shape consistent with the module: batch=2, in_features=10 (grid=(1,)).
    x = jax.random.normal(kx, (2, DIMS[0]), jnp.float32)
    out = jax.block_until_ready(simple_mlp_forward(x, padded_params))
    ref = mlp_reference(x, params)
    np.testing.assert_allclose(np.asarray(out), np.asarray(ref), rtol=1e-5, atol=1e-5)
    assert out.shape == (2, 1)

    # Multi-step grid + batch-padding path: B=20 -> TB=16, grid=(2,).
    key, kx2 = jax.random.split(key)
    x2 = jax.random.normal(kx2, (20, DIMS[0]), jnp.float32)
    out2 = jax.block_until_ready(simple_mlp_forward(x2, padded_params))
    ref2 = mlp_reference(x2, params)
    np.testing.assert_allclose(np.asarray(out2), np.asarray(ref2), rtol=1e-5, atol=1e-5)
    assert out2.shape == (20, 1)

    # bf16 matmul-input / f32-accumulate path (v6e/v7x MXU lever), loose tolerance.
    key, kx3 = jax.random.split(key)
    x3 = jax.random.normal(kx3, (256, DIMS[0]), jnp.float32)
    out3 = jax.block_until_ready(
        simple_mlp_forward(x3, padded_params, compute_dtype=jnp.bfloat16))
    ref3 = mlp_reference(x3, params)
    np.testing.assert_allclose(np.asarray(out3), np.asarray(ref3), rtol=1e-1, atol=1e-1)
    assert out3.shape == (256, 1)

    print("KERNEL_OK")
</pallas_src>

<mosaic_0001>
module attributes {stable_mosaic.version = 11 : i64} {
  func.func @mlp_kernel(%arg0: i32, %arg1: memref<8x10xf32, #tpu.memory_space<vmem>>, %arg2: memref<10x128xf32, #tpu.memory_space<vmem>>, %arg3: memref<1x128xf32, #tpu.memory_space<vmem>>, %arg4: memref<128x128xf32, #tpu.memory_space<vmem>>, %arg5: memref<1x128xf32, #tpu.memory_space<vmem>>, %arg6: memref<128x256xf32, #tpu.memory_space<vmem>>, %arg7: memref<1x256xf32, #tpu.memory_space<vmem>>, %arg8: memref<256x128xf32, #tpu.memory_space<vmem>>, %arg9: memref<1x128xf32, #tpu.memory_space<vmem>>, %arg10: memref<128x128xf32, #tpu.memory_space<vmem>>, %arg11: memref<1x128xf32, #tpu.memory_space<vmem>>, %arg12: memref<1x128xf32, #tpu.memory_space<vmem>>, %arg13: memref<1x1xf32, #tpu.memory_space<vmem>>, %arg14: memref<8x1xf32, #tpu.memory_space<vmem>>) attributes {dimension_semantics = [#tpu.dimension_semantics<parallel>], iteration_bounds = array<i64: 1>, scalar_prefetch = 0 : i64, scratch_operands = 0 : i64, tpu.core_type = #tpu.core_type<tc>, window_params = [{transform_indices = @transform_0, window_bounds = array<i64: 8, 10>}, {pipeline_mode = #tpu.pipeline_mode<synchronous>, transform_indices = @transform_1, window_bounds = array<i64: 10, 128>}, {pipeline_mode = #tpu.pipeline_mode<synchronous>, transform_indices = @transform_2, window_bounds = array<i64: 1, 128>}, {pipeline_mode = #tpu.pipeline_mode<synchronous>, transform_indices = @transform_3, window_bounds = array<i64: 128, 128>}, {pipeline_mode = #tpu.pipeline_mode<synchronous>, transform_indices = @transform_4, window_bounds = array<i64: 1, 128>}, {pipeline_mode = #tpu.pipeline_mode<synchronous>, transform_indices = @transform_5, window_bounds = array<i64: 128, 256>}, {pipeline_mode = #tpu.pipeline_mode<synchronous>, transform_indices = @transform_6, window_bounds = array<i64: 1, 256>}, {pipeline_mode = #tpu.pipeline_mode<synchronous>, transform_indices = @transform_7, window_bounds = array<i64: 256, 128>}, {pipeline_mode = #tpu.pipeline_mode<synchronous>, transform_indices = @transform_8, window_bounds = array<i64: 1, 128>}, {pipeline_mode = #tpu.pipeline_mode<synchronous>, transform_indices = @transform_9, window_bounds = array<i64: 128, 128>}, {pipeline_mode = #tpu.pipeline_mode<synchronous>, transform_indices = @transform_10, window_bounds = array<i64: 1, 128>}, {pipeline_mode = #tpu.pipeline_mode<synchronous>, transform_indices = @transform_11, window_bounds = array<i64: 1, 128>}, {pipeline_mode = #tpu.pipeline_mode<synchronous>, transform_indices = @transform_12, window_bounds = array<i64: 1, 1>}, {transform_indices = @transform_13, window_bounds = array<i64: 8, 1>}]} {
    %c0 = arith.constant 0 : index
    %c0_0 = arith.constant 0 : index
    %0 = vector.load %arg1[%c0, %c0_0] : memref<8x10xf32, #tpu.memory_space<vmem>>, vector<8x10xf32>
    %c0_1 = arith.constant 0 : index
    %c0_2 = arith.constant 0 : index
    %1 = vector.load %arg2[%c0_1, %c0_2] : memref<10x128xf32, #tpu.memory_space<vmem>>, vector<10x128xf32>
    %cst = arith.constant dense<0.000000e+00> : vector<8x128xf32>
    %2 = tpu.matmul %0, %1, %cst {dimension_numbers = #tpu.dot_dimension_numbers<[1], [0], [0], [1], [0, 0, 1, 1], [], []>} : vector<8x10xf32>, vector<10x128xf32>, vector<8x128xf32> -> vector<8x128xf32>
    %c0_3 = arith.constant 0 : index
    %c0_4 = arith.constant 0 : index
    %3 = vector.load %arg3[%c0_3, %c0_4] : memref<1x128xf32, #tpu.memory_space<vmem>>, vector<1x128xf32>
    %4 = vector.broadcast %3 : vector<1x128xf32> to vector<8x128xf32>
    %5 = arith.addf %2, %4 : vector<8x128xf32>
    %cst_5 = arith.constant 0.000000e+00 : f32
    %6 = vector.broadcast %cst_5 : f32 to vector<8x128xf32>
    %7 = arith.maximumf %5, %6 : vector<8x128xf32>
    %c0_6 = arith.constant 0 : index
    %c0_7 = arith.constant 0 : index
    %8 = vector.load %arg4[%c0_6, %c0_7] : memref<128x128xf32, #tpu.memory_space<vmem>>, vector<128x128xf32>
    %cst_8 = arith.constant dense<0.000000e+00> : vector<8x128xf32>
    %9 = tpu.matmul %7, %8, %cst_8 {dimension_numbers = #tpu.dot_dimension_numbers<[1], [0], [0], [1], [0, 0, 1, 1], [], []>} : vector<8x128xf32>, vector<128x128xf32>, vector<8x128xf32> -> vector<8x128xf32>
    %c0_9 = arith.constant 0 : index
    %c0_10 = arith.constant 0 : index
    %10 = vector.load %arg5[%c0_9, %c0_10] : memref<1x128xf32, #tpu.memory_space<vmem>>, vector<1x128xf32>
    %11 = vector.broadcast %10 : vector<1x128xf32> to vector<8x128xf32>
    %12 = arith.addf %9, %11 : vector<8x128xf32>
    %cst_11 = arith.constant 0.000000e+00 : f32
    %13 = vector.broadcast %cst_11 : f32 to vector<8x128xf32>
    %14 = arith.maximumf %12, %13 : vector<8x128xf32>
    %c0_12 = arith.constant 0 : index
    %c0_13 = arith.constant 0 : index
    %15 = vector.load %arg6[%c0_12, %c0_13] : memref<128x256xf32, #tpu.memory_space<vmem>>, vector<128x256xf32>
    %cst_14 = arith.constant dense<0.000000e+00> : vector<8x256xf32>
    %16 = tpu.matmul %14, %15, %cst_14 {dimension_numbers = #tpu.dot_dimension_numbers<[1], [0], [0], [1], [0, 0, 1, 1], [], []>} : vector<8x128xf32>, vector<128x256xf32>, vector<8x256xf32> -> vector<8x256xf32>
    %c0_15 = arith.constant 0 : index
    %c0_16 = arith.constant 0 : index
    %17 = vector.load %arg7[%c0_15, %c0_16] : memref<1x256xf32, #tpu.memory_space<vmem>>, vector<1x256xf32>
    %18 = vector.broadcast %17 : vector<1x256xf32> to vector<8x256xf32>
    %19 = arith.addf %16, %18 : vector<8x256xf32>
    %cst_17 = arith.constant 0.000000e+00 : f32
    %20 = vector.broadcast %cst_17 : f32 to vector<8x256xf32>
    %21 = arith.maximumf %19, %20 : vector<8x256xf32>
    %c0_18 = arith.constant 0 : index
    %c0_19 = arith.constant 0 : index
    %22 = vector.load %arg8[%c0_18, %c0_19] : memref<256x128xf32, #tpu.memory_space<vmem>>, vector<256x128xf32>
    %cst_20 = arith.constant dense<0.000000e+00> : vector<8x128xf32>
    %23 = tpu.matmul %21, %22, %cst_20 {dimension_numbers = #tpu.dot_dimension_numbers<[1], [0], [0], [1], [0, 0, 1, 1], [], []>} : vector<8x256xf32>, vector<256x128xf32>, vector<8x128xf32> -> vector<8x128xf32>
    %c0_21 = arith.constant 0 : index
    %c0_22 = arith.constant 0 : index
    %24 = vector.load %arg9[%c0_21, %c0_22] : memref<1x128xf32, #tpu.memory_space<vmem>>, vector<1x128xf32>
    %25 = vector.broadcast %24 : vector<1x128xf32> to vector<8x128xf32>
    %26 = arith.addf %23, %25 : vector<8x128xf32>
    %cst_23 = arith.constant 0.000000e+00 : f32
    %27 = vector.broadcast %cst_23 : f32 to vector<8x128xf32>
    %28 = arith.maximumf %26, %27 : vector<8x128xf32>
    %c0_24 = arith.constant 0 : index
    %c0_25 = arith.constant 0 : index
    %29 = vector.load %arg10[%c0_24, %c0_25] : memref<128x128xf32, #tpu.memory_space<vmem>>, vector<128x128xf32>
    %cst_26 = arith.constant dense<0.000000e+00> : vector<8x128xf32>
    %30 = tpu.matmul %28, %29, %cst_26 {dimension_numbers = #tpu.dot_dimension_numbers<[1], [0], [0], [1], [0, 0, 1, 1], [], []>} : vector<8x128xf32>, vector<128x128xf32>, vector<8x128xf32> -> vector<8x128xf32>
    %c0_27 = arith.constant 0 : index
    %c0_28 = arith.constant 0 : index
    %31 = vector.load %arg11[%c0_27, %c0_28] : memref<1x128xf32, #tpu.memory_space<vmem>>, vector<1x128xf32>
    %32 = vector.broadcast %31 : vector<1x128xf32> to vector<8x128xf32>
    %33 = arith.addf %30, %32 : vector<8x128xf32>
    %cst_29 = arith.constant 0.000000e+00 : f32
    %34 = vector.broadcast %cst_29 : f32 to vector<8x128xf32>
    %35 = arith.maximumf %33, %34 : vector<8x128xf32>
    %c0_30 = arith.constant 0 : index
    %c0_31 = arith.constant 0 : index
    %36 = vector.load %arg12[%c0_30, %c0_31] : memref<1x128xf32, #tpu.memory_space<vmem>>, vector<1x128xf32>
    %37 = vector.broadcast %36 : vector<1x128xf32> to vector<8x128xf32>
    %38 = arith.mulf %35, %37 : vector<8x128xf32>
    %cst_32 = arith.constant dense<0.000000e+00> : vector<8xf32>
    %39 = vector.multi_reduction <add>, %38, %cst_32 [1] : vector<8x128xf32> to vector<8xf32>
    %40 = vector.shape_cast %39 : vector<8xf32> to vector<8x1xf32>
    %c0_33 = arith.constant 0 : index
    %c0_34 = arith.constant 0 : index
    %41 = vector.load %arg13[%c0_33, %c0_34] : memref<1x1xf32, #tpu.memory_space<vmem>>, vector<1x1xf32>
    %42 = vector.broadcast %41 : vector<1x1xf32> to vector<8x1xf32>
    %43 = arith.addf %40, %42 : vector<8x1xf32>
    %c0_35 = arith.constant 0 : index
    %c0_36 = arith.constant 0 : index
    %44 = vector.load %arg14[%c0_35, %c0_36] : memref<8x1xf32, #tpu.memory_space<vmem>>, vector<8x1xf32>
    tpu.vector_store %arg14[%c0_35, %c0_36], %43 {strides = array<i32>} : memref<8x1xf32, #tpu.memory_space<vmem>>, vector<8x1xf32>,
    return
  }
  func.func @transform_0(%arg0: i32) -> (i32, i32) {
    %c0_i32 = arith.constant 0 : i32
    %c0_i32_0 = arith.constant 0 : i32
    return %arg0, %c0_i32 : i32, i32
  }
  func.func @transform_1(%arg0: i32) -> (i32, i32) {
    %c0_i32 = arith.constant 0 : i32
    %c0_i32_0 = arith.constant 0 : i32
    %c0_i32_1 = arith.constant 0 : i32
    return %c0_i32, %c0_i32_0 : i32, i32
  }
  func.func @transform_2(%arg0: i32) -> (i32, i32) {
    %c0_i32 = arith.constant 0 : i32
    %c0_i32_0 = arith.constant 0 : i32
    %c0_i32_1 = arith.constant 0 : i32
    return %c0_i32, %c0_i32_0 : i32, i32
  }
  func.func @transform_3(%arg0: i32) -> (i32, i32) {
    %c0_i32 = arith.constant 0 : i32
    %c0_i32_0 = arith.constant 0 : i32
    %c0_i32_1 = arith.constant 0 : i32
    return %c0_i32, %c0_i32_0 : i32, i32
  }
  func.func @transform_4(%arg0: i32) -> (i32, i32) {
    %c0_i32 = arith.constant 0 : i32
    %c0_i32_0 = arith.constant 0 : i32
    %c0_i32_1 = arith.constant 0 : i32
    return %c0_i32, %c0_i32_0 : i32, i32
  }
  func.func @transform_5(%arg0: i32) -> (i32, i32) {
    %c0_i32 = arith.constant 0 : i32
    %c0_i32_0 = arith.constant 0 : i32
    %c0_i32_1 = arith.constant 0 : i32
    return %c0_i32, %c0_i32_0 : i32, i32
  }
  func.func @transform_6(%arg0: i32) -> (i32, i32) {
    %c0_i32 = arith.constant 0 : i32
    %c0_i32_0 = arith.constant 0 : i32
    %c0_i32_1 = arith.constant 0 : i32
    return %c0_i32, %c0_i32_0 : i32, i32
  }
  func.func @transform_7(%arg0: i32) -> (i32, i32) {
    %c0_i32 = arith.constant 0 : i32
    %c0_i32_0 = arith.constant 0 : i32
    %c0_i32_1 = arith.constant 0 : i32
    return %c0_i32, %c0_i32_0 : i32, i32
  }
  func.func @transform_8(%arg0: i32) -> (i32, i32) {
    %c0_i32 = arith.constant 0 : i32
    %c0_i32_0 = arith.constant 0 : i32
    %c0_i32_1 = arith.constant 0 : i32
    return %c0_i32, %c0_i32_0 : i32, i32
  }
  func.func @transform_9(%arg0: i32) -> (i32, i32) {
    %c0_i32 = arith.constant 0 : i32
    %c0_i32_0 = arith.constant 0 : i32
    %c0_i32_1 = arith.constant 0 : i32
    return %c0_i32, %c0_i32_0 : i32, i32
  }
  func.func @transform_10(%arg0: i32) -> (i32, i32) {
    %c0_i32 = arith.constant 0 : i32
    %c0_i32_0 = arith.constant 0 : i32
    %c0_i32_1 = arith.constant 0 : i32
    return %c0_i32, %c0_i32_0 : i32, i32
  }
  func.func @transform_11(%arg0: i32) -> (i32, i32) {
    %c0_i32 = arith.constant 0 : i32
    %c0_i32_0 = arith.constant 0 : i32
    %c0_i32_1 = arith.constant 0 : i32
    return %c0_i32, %c0_i32_0 : i32, i32
  }
  func.func @transform_12(%arg0: i32) -> (i32, i32) {
    %c0_i32 = arith.constant 0 : i32
    %c0_i32_0 = arith.constant 0 : i32
    %c0_i32_1 = arith.constant 0 : i32
    return %c0_i32, %c0_i32_0 : i32, i32
  }
  func.func @transform_13(%arg0: i32) -> (i32, i32) {
    %c0_i32 = arith.constant 0 : i32
    %c0_i32_0 = arith.constant 0 : i32
    return %arg0, %c0_i32 : i32, i32
  }
}

</mosaic_0001>

<llo_original>
// kernel: tpu_custom_call.1
$region0: #{tpu_custom_call.1}
  #allocation0 [shape = 'u32[]', space=smem, size = 0x4, offset = 0x4, fixed_abs, tag = 'smem constant byte address 0x4 - core index']
  #allocation1 [shape = 'u32[144,128]{1,0:T(1,128)}', space=vmem, size = 0x12000, scoped, tag = 'internal scratch']
  #allocation2 [shape = 'f32[1,1]{1,0:T(1,128)S(1)}', space=vmem, size = 0x200, scoped, tag = 'scoped memory for tpu_custom_call.1']
  %s0 = inlined_call_operand.hbm [shape: f32[8,10], index: 0, kind: input, shape index: {}]
  %s1 = inlined_call_operand.hbm [shape: f32[10,128], index: 1, kind: input, shape index: {}]
  %s2 = inlined_call_operand.vmem [shape: f32[1,128], index: 2, kind: input, shape index: {}]
  %s3 = inlined_call_operand.hbm [shape: f32[128,128], index: 3, kind: input, shape index: {}]
  %s4 = inlined_call_operand.vmem [shape: f32[1,128], index: 4, kind: input, shape index: {}]
  %s5 = inlined_call_operand.hbm [shape: f32[128,256], index: 5, kind: input, shape index: {}]
  %s6 = inlined_call_operand.vmem [shape: f32[1,256], index: 6, kind: input, shape index: {}]
  %s7 = inlined_call_operand.hbm [shape: f32[256,128], index: 7, kind: input, shape index: {}]
  %s8 = inlined_call_operand.vmem [shape: f32[1,128], index: 8, kind: input, shape index: {}]
  %s9 = inlined_call_operand.hbm [shape: f32[128,128], index: 9, kind: input, shape index: {}]
  %s10 = inlined_call_operand.vmem [shape: f32[1,128], index: 10, kind: input, shape index: {}]
  %s11 = inlined_call_operand.vmem [shape: f32[1,128], index: 11, kind: input, shape index: {}]
  %s12 = inlined_call_operand.<no memory space> [shape: f32[1,1], index: 12, kind: input, shape index: {}]
  %s13 = inlined_call_operand.vmem [shape: f32[8,1], index: 13, kind: output, shape index: {}]
  %s14 = sld [smem:[#allocation0]]
  $region86: #{tpu_custom_call.1} parent=0
    _
  %s16 = ssub.s32 1, %s14
  %s17 = scalar_select 0, %s16, %s14
  %v18 = vstv %s12
  %19 = vst [vmem:[#allocation2] sm:$0x1] %v18
  $region1: #{tpu_custom_call.1} parent=0
    #allocation3 [shape = 'u8[4096]{0}', space=vmem, size = 0x1000, scoped, tag = 'input window, operand 0, single buffered']
    #allocation4 [shape = 's32[1]{0}', space=sflag, size = 0x4, scoped, tag = 'scoped memory for tpu_custom_call.1']
    #allocation5 [shape = 'u8[8192]{0}', space=vmem, size = 0x2000, scoped, tag = 'input window, operand 1, single buffered']
    #allocation6 [shape = 's32[1]{0}', space=sflag, size = 0x4, scoped, tag = 'scoped memory for tpu_custom_call.1']
    #allocation7 [shape = 'u8[65536]{0}', space=vmem, size = 0x10000, scoped, tag = 'input window, operand 3, single buffered']
    #allocation8 [shape = 'u8[131072]{0}', space=vmem, size = 0x20000, scoped, tag = 'input window, operand 5, single buffered']
    #allocation9 [shape = 's32[1]{0}', space=sflag, size = 0x4, scoped, tag = 'scoped memory for tpu_custom_call.1']
    #allocation10 [shape = 'u8[131072]{0}', space=vmem, size = 0x20000, scoped, tag = 'input window, operand 7, single buffered']
    #allocation11 [shape = 'u8[65536]{0}', space=vmem, size = 0x10000, scoped, tag = 'input window, operand 9, single buffered']
    #allocation12 [shape = 's32[1]{0}', space=sflag, size = 0x4, scoped, tag = 'scoped memory for tpu_custom_call.1']
    %20 = vsyncpa [#allocation4], 0
    %21 = vsyncpa [#allocation6], 0
    %22 = vsyncpa [#allocation9], 0
    %23 = vsyncpa [#allocation12], 0
    // Predicated region
    $region2: #{tpu_custom_call.1} parent=1 // pred_check
      _
    $region3: #{tpu_custom_call.1} parent=1 // pred_check_branch
      %25 = sbr.rel (0) target = $region5
    $region4: #{tpu_custom_call.1} parent=1 // pred_region
      %s27 = ssub.s32 128, 128
      %28 = vsyncadd [#allocation4], %s27
      %s30 = sshll.u32 [#allocation3], 4
      %s31 = int_to_ptr.vmem [resolvable:$true] %s30
      %33 = dma.hbm_to_vmem [thread:$0]  %s0, 128, %s31, [#allocation4]
    $region5: #{tpu_custom_call.1} parent=1 // pred_fallthru
      _
    // Predicated region
    $region6: #{tpu_custom_call.1} parent=1 // pred_check
      _
    $region7: #{tpu_custom_call.1} parent=1 // pred_check_branch
      %35 = sbr.rel (0) target = $region9
    $region8: #{tpu_custom_call.1} parent=1 // pred_region
      %s37 = ssub.s32 256, 256
      %38 = vsyncadd [#allocation6], %s37
      %s39 = sshll.u32 [#allocation5], 4
      %s40 = int_to_ptr.vmem [resolvable:$true] %s39
      %45 = dma.hbm_to_vmem [thread:$0]  %s1, 256, %s40, [#allocation6], 128, 128, 8
    $region9: #{tpu_custom_call.1} parent=1 // pred_fallthru
      _
    // Predicated region
    $region10: #{tpu_custom_call.1} parent=1 // pred_check
      _
    $region11: #{tpu_custom_call.1} parent=1 // pred_check_branch
      %47 = sbr.rel (0) target = $region13
    $region12: #{tpu_custom_call.1} parent=1 // pred_region
      _
    $region13: #{tpu_custom_call.1} parent=1 // pred_fallthru
      _
    // Predicated region
    $region14: #{tpu_custom_call.1} parent=1 // pred_check
      _
    $region15: #{tpu_custom_call.1} parent=1 // pred_check_branch
      %49 = sbr.rel (0) target = $region17
    $region16: #{tpu_custom_call.1} parent=1 // pred_region
      %s51 = ssub.s32 2048, 2048
      %52 = vsyncadd [#allocation6], %s51
      %s53 = sshll.u32 [#allocation7], 4
      %s54 = int_to_ptr.vmem [resolvable:$true] %s53
      %59 = dma.hbm_to_vmem [thread:$0]  %s3, 2048, %s54, [#allocation6], 128, 128, 8
    $region17: #{tpu_custom_call.1} parent=1 // pred_fallthru
      _
    // Predicated region
    $region18: #{tpu_custom_call.1} parent=1 // pred_check
      _
    $region19: #{tpu_custom_call.1} parent=1 // pred_check_branch
      %61 = sbr.rel (0) target = $region21
    $region20: #{tpu_custom_call.1} parent=1 // pred_region
      _
    $region21: #{tpu_custom_call.1} parent=1 // pred_fallthru
      _
    // Predicated region
    $region22: #{tpu_custom_call.1} parent=1 // pred_check
      _
    $region23: #{tpu_custom_call.1} parent=1 // pred_check_branch
      %63 = sbr.rel (0) target = $region25
    $region24: #{tpu_custom_call.1} parent=1 // pred_region
      %s65 = ssub.s32 4096, 4096
      %66 = vsyncadd [#allocation9], %s65
      %s67 = sshll.u32 [#allocation8], 4
      %s68 = int_to_ptr.vmem [resolvable:$true] %s67
      %73 = dma.hbm_to_vmem [thread:$0]  %s5, 4096, %s68, [#allocation9], 256, 256, 16
    $region25: #{tpu_custom_call.1} parent=1 // pred_fallthru
      _
    // Predicated region
    $region26: #{tpu_custom_call.1} parent=1 // pred_check
      _
    $region27: #{tpu_custom_call.1} parent=1 // pred_check_branch
      %75 = sbr.rel (0) target = $region29
    $region28: #{tpu_custom_call.1} parent=1 // pred_region
      _
    $region29: #{tpu_custom_call.1} parent=1 // pred_fallthru
      _
    // Predicated region
    $region30: #{tpu_custom_call.1} parent=1 // pred_check
      _
    $region31: #{tpu_custom_call.1} parent=1 // pred_check_branch
      %77 = sbr.rel (0) target = $region33
    $region32: #{tpu_custom_call.1} parent=1 // pred_region
      %s79 = ssub.s32 4096, 4096
      %80 = vsyncadd [#allocation9], %s79
      %s81 = sshll.u32 [#allocation10], 4
      %s82 = int_to_ptr.vmem [resolvable:$true] %s81
      %87 = dma.hbm_to_vmem [thread:$0]  %s7, 4096, %s82, [#allocation9], 128, 128, 8
    $region33: #{tpu_custom_call.1} parent=1 // pred_fallthru
      _
    // Predicated region
    $region34: #{tpu_custom_call.1} parent=1 // pred_check
      _
    $region35: #{tpu_custom_call.1} parent=1 // pred_check_branch
      %89 = sbr.rel (0) target = $region37
    $region36: #{tpu_custom_call.1} parent=1 // pred_region
      _
    $region37: #{tpu_custom_call.1} parent=1 // pred_fallthru
      _
    // Predicated region
    $region38: #{tpu_custom_call.1} parent=1 // pred_check
      _
    $region39: #{tpu_custom_call.1} parent=1 // pred_check_branch
      %91 = sbr.rel (0) target = $region41
    $region40: #{tpu_custom_call.1} parent=1 // pred_region
      %s93 = ssub.s32 2048, 2048
      %94 = vsyncadd [#allocation12], %s93
      %s95 = sshll.u32 [#allocation11], 4
      %s96 = int_to_ptr.vmem [resolvable:$true] %s95
      %101 = dma.hbm_to_vmem [thread:$0]  %s9, 2048, %s96, [#allocation12], 128, 128, 8
    $region41: #{tpu_custom_call.1} parent=1 // pred_fallthru
      _
    // Predicated region
    $region42: #{tpu_custom_call.1} parent=1 // pred_check
      _
    $region43: #{tpu_custom_call.1} parent=1 // pred_check_branch
      %103 = sbr.rel (0) target = $region45
    $region44: #{tpu_custom_call.1} parent=1 // pred_region
      _
    $region45: #{tpu_custom_call.1} parent=1 // pred_fallthru
      _
    // Predicated region
    $region46: #{tpu_custom_call.1} parent=1 // pred_check
      _
    $region47: #{tpu_custom_call.1} parent=1 // pred_check_branch
      %105 = sbr.rel (0) target = $region49
    $region48: #{tpu_custom_call.1} parent=1 // pred_region
      _
    $region49: #{tpu_custom_call.1} parent=1 // pred_fallthru
      _
    // Predicated region
    $region50: #{tpu_custom_call.1} parent=1 // pred_check
      _
    $region51: #{tpu_custom_call.1} parent=1 // pred_check_branch
      %107 = sbr.rel (0) target = $region53
    $region52: #{tpu_custom_call.1} parent=1 // pred_region
      _
    $region53: #{tpu_custom_call.1} parent=1 // pred_fallthru
      _
    // Predicated region
    $region54: #{tpu_custom_call.1} parent=1 // pred_check
      _
    $region55: #{tpu_custom_call.1} parent=1 // pred_check_branch
      %109 = sbr.rel (0) target = $region57
    $region56: #{tpu_custom_call.1} parent=1 // pred_region
      %110 = dma.done [#allocation4], 128
    $region57: #{tpu_custom_call.1} parent=1 // pred_fallthru
      _
    // Predicated region
    $region58: #{tpu_custom_call.1} parent=1 // pred_check
      _
    $region59: #{tpu_custom_call.1} parent=1 // pred_check_branch
      %112 = sbr.rel (0) target = $region61
    $region60: #{tpu_custom_call.1} parent=1 // pred_region
      %113 = dma.done [#allocation6], 256
    $region61: #{tpu_custom_call.1} parent=1 // pred_fallthru
      _
    // Predicated region
    $region62: #{tpu_custom_call.1} parent=1 // pred_check
      _
    $region63: #{tpu_custom_call.1} parent=1 // pred_check_branch
      %115 = sbr.rel (0) target = $region65
    $region64: #{tpu_custom_call.1} parent=1 // pred_region
      %116 = dma.done [#allocation6], 2048
    $region65: #{tpu_custom_call.1} parent=1 // pred_fallthru
      _
    // Predicated region
    $region66: #{tpu_custom_call.1} parent=1 // pred_check
      _
    $region67: #{tpu_custom_call.1} parent=1 // pred_check_branch
      %118 = sbr.rel (0) target = $region69
    $region68: #{tpu_custom_call.1} parent=1 // pred_region
      %119 = dma.done [#allocation9], 4096
    $region69: #{tpu_custom_call.1} parent=1 // pred_fallthru
      _
    // Predicated region
    $region70: #{tpu_custom_call.1} parent=1 // pred_check
      _
    $region71: #{tpu_custom_call.1} parent=1 // pred_check_branch
      %121 = sbr.rel (0) target = $region73
    $region72: #{tpu_custom_call.1} parent=1 // pred_region
      %122 = dma.done [#allocation9], 4096
    $region73: #{tpu_custom_call.1} parent=1 // pred_fallthru
      _
    // Predicated region
    $region74: #{tpu_custom_call.1} parent=1 // pred_check
      _
    $region75: #{tpu_custom_call.1} parent=1 // pred_check_branch
      %124 = sbr.rel (0) target = $region77
    $region76: #{tpu_custom_call.1} parent=1 // pred_region
      %125 = dma.done [#allocation12], 2048
    $region77: #{tpu_custom_call.1} parent=1 // pred_fallthru
      _
    %v126 = vld [vmem:[#allocation3] sm:$0xff]
    %v127 = vld [vmem:[#allocation5] sm:$0xff]
    %v128 = vld [vmem:[#allocation5 + $0x8] sm:$0x3]
    %v129 = vld [vmem:[%s2] sm:$0x1]
    %v131 = vlaneseq
    %v132 = vshrl.u32 %v131, 7
    %v133 = vsub.s32 0, %v132
    %v134 = vrot.slane %v129, %v133
    %vm136 = vcmask 80896
    %v138 = vsel %vm136, %v126, 0
    %vm140 = vcmask 1041408
    %v142 = vsel %vm140, %v128, 0
    %144 = vmatprep.subr.mxu0 0.0
    %145 = vmatpush1.msra.mxu0 %v127
    %146 = vmatprep.subr.mxu0 0.0
    %147 = vmatpush1.msra.mxu0 %v142
    %148 = vmatprep.subr.mxu0 0.0
    %149 = vmatpush1.msra.mxu0 0.0
    %150 = vmatprep.subr.mxu0 0.0
    %151 = vmatpush1.msra.mxu0 0.0
    %152 = vmatprep.subr.mxu0 0.0
    %153 = vmatpush1.msra.mxu0 0.0
    %154 = vmatprep.subr.mxu0 0.0
    %155 = vmatpush1.msra.mxu0 0.0
    %156 = vmatprep.subr.mxu0 0.0
    %157 = vmatpush1.msra.mxu0 0.0
    %158 = vmatprep.subr.mxu0 0.0
    %159 = vmatpush1.msra.mxu0 0.0
    %160 = vmatprep.subr.mxu0 0.0
    %161 = vmatpush1.msra.mxu0 0.0
    %162 = vmatprep.subr.mxu0 0.0
    %163 = vmatpush1.msra.mxu0 0.0
    %164 = vmatprep.subr.mxu0 0.0
    %165 = vmatpush1.msra.mxu0 0.0
    %166 = vmatprep.subr.mxu0 0.0
    %167 = vmatpush1.msra.mxu0 0.0
    %168 = vmatprep.subr.mxu0 0.0
    %169 = vmatpush1.msra.mxu0 0.0
    %170 = vmatprep.subr.mxu0 0.0
    %171 = vmatpush1.msra.mxu0 0.0
    %172 = vmatprep.subr.mxu0 0.0
    %173 = vmatpush1.msra.mxu0 0.0
    %174 = vmatprep.subr.mxu0 0.0
    %175 = vmatpush1.msra.mxu0 0.0
    %176 = vmatprep.subr.mxu0 0.0
    %177 = vmatpush1.msra.mxu0 0.0
    %178 = vmatprep.subr.mxu0 0.0
    %179 = vmatpush1.msra.mxu0 0.0
    %180 = vmatprep.subr.mxu0 0.0
    %181 = vmatpush1.msra.mxu0 0.0
    %182 = vmatprep.subr.mxu0 0.0
    %183 = vmatpush1.msra.mxu0 0.0
    %184 = vmatprep.subr.mxu0 0.0
    %185 = vmatpush1.msra.mxu0 0.0
    %186 = vmatprep.subr.mxu0 0.0
    %187 = vmatpush1.msra.mxu0 0.0
    %188 = vmatprep.subr.mxu0 0.0
    %189 = vmatpush1.msra.mxu0 0.0
    %190 = vmatprep.subr.mxu0 0.0
    %191 = vmatpush1.msra.mxu0 0.0
    %192 = vmatprep.subr.mxu0 0.0
    %193 = vmatpush1.msra.mxu0 0.0
    %194 = vmatprep.subr.mxu0 0.0
    %195 = vmatpush1.msra.mxu0 0.0
    %196 = vmatprep.subr.mxu0 0.0
    %197 = vmatpush1.msra.mxu0 0.0
    %198 = vmatprep.subr.mxu0 0.0
    %199 = vmatpush1.msra.mxu0 0.0
    %200 = vmatprep.subr.mxu0 0.0
    %201 = vmatpush1.msra.mxu0 0.0
    %202 = vmatprep.subr.mxu0 0.0
    %203 = vmatpush1.msra.mxu0 0.0
    %204 = vmatprep.subr.mxu0 0.0
    %205 = vmatpush1.msra.mxu0 0.0
    %206 = vmatprep.subr.mxu0 0.0
    %207 = vmatpush1.msra.mxu0 0.0
    %208 = vmatprep.mubr.f32.mxu0 0.0
    %209 = vmatmul.mubr.f32.gmra.mrb[0].mxu0 %v138
    %v210 = vpop.f32.mrb[0].mxu0
    %v211 = vadd.f32 %v134, %v210
    %v212 = vpop.f32.mrb[0].mxu0
    %213 = vdwg.mxu0
    %v214 = vmax.f32 %v211, 0.0
    %v215 = vld [vmem:[#allocation7] sm:$0xff]
    %v216 = vld [vmem:[#allocation7 + $0x8] sm:$0xff]
    %v217 = vld [vmem:[#allocation7 + $0x10] sm:$0xff]
    %v218 = vld [vmem:[#allocation7 + $0x18] sm:$0xff]
    %v219 = vld [vmem:[#allocation7 + $0x20] sm:$0xff]
    %v220 = vld [vmem:[#allocation7 + $0x28] sm:$0xff]
    %v221 = vld [vmem:[#allocation7 + $0x30] sm:$0xff]
    %v222 = vld [vmem:[#allocation7 + $0x38] sm:$0xff]
    %v223 = vld [vmem:[#allocation7 + $0x40] sm:$0xff]
    %v224 = vld [vmem:[#allocation7 + $0x48] sm:$0xff]
    %v225 = vld [vmem:[#allocation7 + $0x50] sm:$0xff]
    %v226 = vld [vmem:[#allocation7 + $0x58] sm:$0xff]
    %v227 = vld [vmem:[#allocation7 + $0x60] sm:$0xff]
    %v228 = vld [vmem:[#allocation7 + $0x68] sm:$0xff]
    %v229 = vld [vmem:[#allocation7 + $0x70] sm:$0xff]
    %v230 = vld [vmem:[#allocation7 + $0x78] sm:$0xff]
    %v231 = vld [vmem:[%s4] sm:$0x1]
    %v233 = vlaneseq
    %v234 = vshrl.u32 %v233, 7
    %v235 = vsub.s32 0, %v234
    %v236 = vrot.slane %v231, %v235
    %238 = vmatprep.subr.mxu0 0.0
    %239 = vmatpush1.msra.mxu0 %v215
    %240 = vmatprep.subr.mxu0 0.0
    %241 = vmatpush1.msra.mxu0 %v216
    %242 = vmatprep.subr.mxu0 0.0
    %243 = vmatpush1.msra.mxu0 %v217
    %244 = vmatprep.subr.mxu0 0.0
    %245 = vmatpush1.msra.mxu0 %v218
    %246 = vmatprep.subr.mxu0 0.0
    %247 = vmatpush1.msra.mxu0 %v219
    %248 = vmatprep.subr.mxu0 0.0
    %249 = vmatpush1.msra.mxu0 %v220
    %250 = vmatprep.subr.mxu0 0.0
    %251 = vmatpush1.msra.mxu0 %v221
    %252 = vmatprep.subr.mxu0 0.0
    %253 = vmatpush1.msra.mxu0 %v222
    %254 = vmatprep.subr.mxu0 0.0
    %255 = vmatpush1.msra.mxu0 %v223
    %256 = vmatprep.subr.mxu0 0.0
    %257 = vmatpush1.msra.mxu0 %v224
    %258 = vmatprep.subr.mxu0 0.0
    %259 = vmatpush1.msra.mxu0 %v225
    %260 = vmatprep.subr.mxu0 0.0
    %261 = vmatpush1.msra.mxu0 %v226
    %262 = vmatprep.subr.mxu0 0.0
    %263 = vmatpush1.msra.mxu0 %v227
    %264 = vmatprep.subr.mxu0 0.0
    %265 = vmatpush1.msra.mxu0 %v228
    %266 = vmatprep.subr.mxu0 0.0
    %267 = vmatpush1.msra.mxu0 %v229
    %268 = vmatprep.subr.mxu0 0.0
    %269 = vmatpush1.msra.mxu0 %v230
    %270 = vmatprep.subr.mxu0 0.0
    %271 = vmatpush1.msra.mxu0 0.0
    %272 = vmatprep.subr.mxu0 0.0
    %273 = vmatpush1.msra.mxu0 0.0
    %274 = vmatprep.subr.mxu0 0.0
    %275 = vmatpush1.msra.mxu0 0.0
    %276 = vmatprep.subr.mxu0 0.0
    %277 = vmatpush1.msra.mxu0 0.0
    %278 = vmatprep.subr.mxu0 0.0
    %279 = vmatpush1.msra.mxu0 0.0
    %280 = vmatprep.subr.mxu0 0.0
    %281 = vmatpush1.msra.mxu0 0.0
    %282 = vmatprep.subr.mxu0 0.0
    %283 = vmatpush1.msra.mxu0 0.0
    %284 = vmatprep.subr.mxu0 0.0
    %285 = vmatpush1.msra.mxu0 0.0
    %286 = vmatprep.subr.mxu0 0.0
    %287 = vmatpush1.msra.mxu0 0.0
    %288 = vmatprep.subr.mxu0 0.0
    %289 = vmatpush1.msra.mxu0 0.0
    %290 = vmatprep.subr.mxu0 0.0
    %291 = vmatpush1.msra.mxu0 0.0
    %292 = vmatprep.subr.mxu0 0.0
    %293 = vmatpush1.msra.mxu0 0.0
    %294 = vmatprep.subr.mxu0 0.0
    %295 = vmatpush1.msra.mxu0 0.0
    %296 = vmatprep.subr.mxu0 0.0
    %297 = vmatpush1.msra.mxu0 0.0
    %298 = vmatprep.subr.mxu0 0.0
    %299 = vmatpush1.msra.mxu0 0.0
    %300 = vmatprep.subr.mxu0 0.0
    %301 = vmatpush1.msra.mxu0 0.0
    %302 = vmatprep.mubr.f32.mxu0 0.0
    %303 = vmatmul.mubr.f32.gmra.mrb[0].mxu0 %v214
    %v304 = vpop.f32.mrb[0].mxu0
    %v305 = vadd.f32 %v236, %v304
    %v306 = vpop.f32.mrb[0].mxu0
    %307 = vdwg.mxu0
    %v308 = vmax.f32 %v305, 0.0
    %v309 = vld [vmem:[#allocation8] sm:$0xff]
    %v310 = vld [vmem:[#allocation8 + $0x8] sm:$0xff]
    %v311 = vld [vmem:[#allocation8 + $0x10] sm:$0xff]
    %v312 = vld [vmem:[#allocation8 + $0x18] sm:$0xff]
    %v313 = vld [vmem:[#allocation8 + $0x20] sm:$0xff]
    %v314 = vld [vmem:[#allocation8 + $0x28] sm:$0xff]
    %v315 = vld [vmem:[#allocation8 + $0x30] sm:$0xff]
    %v316 = vld [vmem:[#allocation8 + $0x38] sm:$0xff]
    %v317 = vld [vmem:[#allocation8 + $0x40] sm:$0xff]
    %v318 = vld [vmem:[#allocation8 + $0x48] sm:$0xff]
    %v319 = vld [vmem:[#allocation8 + $0x50] sm:$0xff]
    %v320 = vld [vmem:[#allocation8 + $0x58] sm:$0xff]
    %v321 = vld [vmem:[#allocation8 + $0x60] sm:$0xff]
    %v322 = vld [vmem:[#allocation8 + $0x68] sm:$0xff]
    %v323 = vld [vmem:[#allocation8 + $0x70] sm:$0xff]
    %v324 = vld [vmem:[#allocation8 + $0x78] sm:$0xff]
    %v325 = vld [vmem:[#allocation8 + $0x80] sm:$0xff]
    %v326 = vld [vmem:[#allocation8 + $0x88] sm:$0xff]
    %v327 = vld [vmem:[#allocation8 + $0x90] sm:$0xff]
    %v328 = vld [vmem:[#allocation8 + $0x98] sm:$0xff]
    %v329 = vld [vmem:[#allocation8 + $0xa0] sm:$0xff]
    %v330 = vld [vmem:[#allocation8 + $0xa8] sm:$0xff]
    %v331 = vld [vmem:[#allocation8 + $0xb0] sm:$0xff]
    %v332 = vld [vmem:[#allocation8 + $0xb8] sm:$0xff]
    %v333 = vld [vmem:[#allocation8 + $0xc0] sm:$0xff]
    %v334 = vld [vmem:[#allocation8 + $0xc8] sm:$0xff]
    %v335 = vld [vmem:[#allocation8 + $0xd0] sm:$0xff]
    %v336 = vld [vmem:[#allocation8 + $0xd8] sm:$0xff]
    %v337 = vld [vmem:[#allocation8 + $0xe0] sm:$0xff]
    %v338 = vld [vmem:[#allocation8 + $0xe8] sm:$0xff]
    %v339 = vld [vmem:[#allocation8 + $0xf0] sm:$0xff]
    %v340 = vld [vmem:[#allocation8 + $0xf8] sm:$0xff]
    %v341 = vld [vmem:[%s6] sm:$0x3]
    %v343 = vlaneseq
    %v344 = vshrl.u32 %v343, 7
    %v345 = vsub.s32 0, %v344
    %v346 = vrot.slane %v341, %v345
    %v347 = vlaneseq
    %v348 = vshrl.u32 %v347, 7
    %v349 = vsub.s32 1, %v348
    %v350 = vrot.slane %v341, %v349
    %353 = vmatprep.subr.mxu0 %v310
    %354 = vmatpush1.msra.mxu0 %v309
    %355 = vmatprep.subr.mxu0 %v312
    %356 = vmatpush1.msra.mxu0 %v311
    %357 = vmatprep.subr.mxu0 %v314
    %358 = vmatpush1.msra.mxu0 %v313
    %359 = vmatprep.subr.mxu0 %v316
    %360 = vmatpush1.msra.mxu0 %v315
    %361 = vmatprep.subr.mxu0 %v318
    %362 = vmatpush1.msra.mxu0 %v317
    %363 = vmatprep.subr.mxu0 %v320
    %364 = vmatpush1.msra.mxu0 %v319
    %365 = vmatprep.subr.mxu0 %v322
    %366 = vmatpush1.msra.mxu0 %v321
    %367 = vmatprep.subr.mxu0 %v324
    %368 = vmatpush1.msra.mxu0 %v323
    %369 = vmatprep.subr.mxu0 %v326
    %370 = vmatpush1.msra.mxu0 %v325
    %371 = vmatprep.subr.mxu0 %v328
    %372 = vmatpush1.msra.mxu0 %v327
    %373 = vmatprep.subr.mxu0 %v330
    %374 = vmatpush1.msra.mxu0 %v329
    %375 = vmatprep.subr.mxu0 %v332
    %376 = vmatpush1.msra.mxu0 %v331
    %377 = vmatprep.subr.mxu0 %v334
    %378 = vmatpush1.msra.mxu0 %v333
    %379 = vmatprep.subr.mxu0 %v336
    %380 = vmatpush1.msra.mxu0 %v335
    %381 = vmatprep.subr.mxu0 %v338
    %382 = vmatpush1.msra.mxu0 %v337
    %383 = vmatprep.subr.mxu0 %v340
    %384 = vmatpush1.msra.mxu0 %v339
    %385 = vmatprep.subr.mxu0 0.0
    %386 = vmatpush1.msra.mxu0 0.0
    %387 = vmatprep.subr.mxu0 0.0
    %388 = vmatpush1.msra.mxu0 0.0
    %389 = vmatprep.subr.mxu0 0.0
    %390 = vmatpush1.msra.mxu0 0.0
    %391 = vmatprep.subr.mxu0 0.0
    %392 = vmatpush1.msra.mxu0 0.0
    %393 = vmatprep.subr.mxu0 0.0
    %394 = vmatpush1.msra.mxu0 0.0
    %395 = vmatprep.subr.mxu0 0.0
    %396 = vmatpush1.msra.mxu0 0.0
    %397 = vmatprep.subr.mxu0 0.0
    %398 = vmatpush1.msra.mxu0 0.0
    %399 = vmatprep.subr.mxu0 0.0
    %400 = vmatpush1.msra.mxu0 0.0
    %401 = vmatprep.subr.mxu0 0.0
    %402 = vmatpush1.msra.mxu0 0.0
    %403 = vmatprep.subr.mxu0 0.0
    %404 = vmatpush1.msra.mxu0 0.0
    %405 = vmatprep.subr.mxu0 0.0
    %406 = vmatpush1.msra.mxu0 0.0
    %407 = vmatprep.subr.mxu0 0.0
    %408 = vmatpush1.msra.mxu0 0.0
    %409 = vmatprep.subr.mxu0 0.0
    %410 = vmatpush1.msra.mxu0 0.0
    %411 = vmatprep.subr.mxu0 0.0
    %412 = vmatpush1.msra.mxu0 0.0
    %413 = vmatprep.subr.mxu0 0.0
    %414 = vmatpush1.msra.mxu0 0.0
    %415 = vmatprep.subr.mxu0 0.0
    %416 = vmatpush1.msra.mxu0 0.0
    %417 = vmatprep.mubr.f32.mxu0 0.0
    %418 = vmatmul.mubr.f32.gmra.mrb[0].mxu0 %v308
    %v419 = vpop.f32.mrb[0].mxu0
    %v420 = vadd.f32 %v346, %v419
    %v421 = vpop.f32.mrb[0].mxu0
    %v422 = vadd.f32 %v350, %v421
    %423 = vdwg.mxu0
    %v424 = vmax.f32 %v420, 0.0
    %v425 = vmax.f32 %v422, 0.0
    %v426 = vld [vmem:[#allocation10] sm:$0xff]
    %v427 = vld [vmem:[#allocation10 + $0x8] sm:$0xff]
    %v428 = vld [vmem:[#allocation10 + $0x10] sm:$0xff]
    %v429 = vld [vmem:[#allocation10 + $0x18] sm:$0xff]
    %v430 = vld [vmem:[#allocation10 + $0x20] sm:$0xff]
    %v431 = vld [vmem:[#allocation10 + $0x28] sm:$0xff]
    %v432 = vld [vmem:[#allocation10 + $0x30] sm:$0xff]
    %v433 = vld [vmem:[#allocation10 + $0x38] sm:$0xff]
    %v434 = vld [vmem:[#allocation10 + $0x40] sm:$0xff]
    %v435 = vld [vmem:[#allocation10 + $0x48] sm:$0xff]
    %v436 = vld [vmem:[#allocation10 + $0x50] sm:$0xff]
    %v437 = vld [vmem:[#allocation10 + $0x58] sm:$0xff]
    %v438 = vld [vmem:[#allocation10 + $0x60] sm:$0xff]
    %v439 = vld [vmem:[#allocation10 + $0x68] sm:$0xff]
    %v440 = vld [vmem:[#allocation10 + $0x70] sm:$0xff]
    %v441 = vld [vmem:[#allocation10 + $0x78] sm:$0xff]
    %v442 = vld [vmem:[#allocation10 + $0x80] sm:$0xff]
    %v443 = vld [vmem:[#allocation10 + $0x88] sm:$0xff]
    %v444 = vld [vmem:[#allocation10 + $0x90] sm:$0xff]
    %v445 = vld [vmem:[#allocation10 + $0x98] sm:$0xff]
    %v446 = vld [vmem:[#allocation10 + $0xa0] sm:$0xff]
    %v447 = vld [vmem:[#allocation10 + $0xa8] sm:$0xff]
    %v448 = vld [vmem:[#allocation10 + $0xb0] sm:$0xff]
    %v449 = vld [vmem:[#allocation10 + $0xb8] sm:$0xff]
    %v450 = vld [vmem:[#allocation10 + $0xc0] sm:$0xff]
    %v451 = vld [vmem:[#allocation10 + $0xc8] sm:$0xff]
    %v452 = vld [vmem:[#allocation10 + $0xd0] sm:$0xff]
    %v453 = vld [vmem:[#allocation10 + $0xd8] sm:$0xff]
    %v454 = vld [vmem:[#allocation10 + $0xe0] sm:$0xff]
    %v455 = vld [vmem:[#allocation10 + $0xe8] sm:$0xff]
    %v456 = vld [vmem:[#allocation10 + $0xf0] sm:$0xff]
    %v457 = vld [vmem:[#allocation10 + $0xf8] sm:$0xff]
    %v458 = vld [vmem:[%s8] sm:$0x1]
    %v460 = vlaneseq
    %v461 = vshrl.u32 %v460, 7
    %v462 = vsub.s32 0, %v461
    %v463 = vrot.slane %v458, %v462
    %465 = vmatprep.subr.mxu0 0.0
    %466 = vmatpush1.msra.mxu0 %v426
    %467 = vmatprep.subr.mxu0 0.0
    %468 = vmatpush1.msra.mxu0 %v427
    %469 = vmatprep.subr.mxu0 0.0
    %470 = vmatpush1.msra.mxu0 %v428
    %471 = vmatprep.subr.mxu0 0.0
    %472 = vmatpush1.msra.mxu0 %v429
    %473 = vmatprep.subr.mxu0 0.0
    %474 = vmatpush1.msra.mxu0 %v430
    %475 = vmatprep.subr.mxu0 0.0
    %476 = vmatpush1.msra.mxu0 %v431
    %477 = vmatprep.subr.mxu0 0.0
    %478 = vmatpush1.msra.mxu0 %v432
    %479 = vmatprep.subr.mxu0 0.0
    %480 = vmatpush1.msra.mxu0 %v433
    %481 = vmatprep.subr.mxu0 0.0
    %482 = vmatpush1.msra.mxu0 %v434
    %483 = vmatprep.subr.mxu0 0.0
    %484 = vmatpush1.msra.mxu0 %v435
    %485 = vmatprep.subr.mxu0 0.0
    %486 = vmatpush1.msra.mxu0 %v436
    %487 = vmatprep.subr.mxu0 0.0
    %488 = vmatpush1.msra.mxu0 %v437
    %489 = vmatprep.subr.mxu0 0.0
    %490 = vmatpush1.msra.mxu0 %v438
    %491 = vmatprep.subr.mxu0 0.0
    %492 = vmatpush1.msra.mxu0 %v439
    %493 = vmatprep.subr.mxu0 0.0
    %494 = vmatpush1.msra.mxu0 %v440
    %495 = vmatprep.subr.mxu0 0.0
    %496 = vmatpush1.msra.mxu0 %v441
    %497 = vmatprep.subr.mxu0 0.0
    %498 = vmatpush1.msra.mxu0 %v442
    %499 = vmatprep.subr.mxu0 0.0
    %500 = vmatpush1.msra.mxu0 %v443
    %501 = vmatprep.subr.mxu0 0.0
    %502 = vmatpush1.msra.mxu0 %v444
    %503 = vmatprep.subr.mxu0 0.0
    %504 = vmatpush1.msra.mxu0 %v445
    %505 = vmatprep.subr.mxu0 0.0
    %506 = vmatpush1.msra.mxu0 %v446
    %507 = vmatprep.subr.mxu0 0.0
    %508 = vmatpush1.msra.mxu0 %v447
    %509 = vmatprep.subr.mxu0 0.0
    %510 = vmatpush1.msra.mxu0 %v448
    %511 = vmatprep.subr.mxu0 0.0
    %512 = vmatpush1.msra.mxu0 %v449
    %513 = vmatprep.subr.mxu0 0.0
    %514 = vmatpush1.msra.mxu0 %v450
    %515 = vmatprep.subr.mxu0 0.0
    %516 = vmatpush1.msra.mxu0 %v451
    %517 = vmatprep.subr.mxu0 0.0
    %518 = vmatpush1.msra.mxu0 %v452
    %519 = vmatprep.subr.mxu0 0.0
    %520 = vmatpush1.msra.mxu0 %v453
    %521 = vmatprep.subr.mxu0 0.0
    %522 = vmatpush1.msra.mxu0 %v454
    %523 = vmatprep.subr.mxu0 0.0
    %524 = vmatpush1.msra.mxu0 %v455
    %525 = vmatprep.subr.mxu0 0.0
    %526 = vmatpush1.msra.mxu0 %v456
    %527 = vmatprep.subr.mxu0 0.0
    %528 = vmatpush1.msra.mxu0 %v457
    %529 = vmatprep.mubr.f32.mxu0 %v425
    %530 = vmatmul.mubr.f32.gmra.mrb[0].mxu0 %v424
    %v531 = vpop.f32.mrb[0].mxu0
    %v532 = vadd.f32 %v463, %v531
    %v533 = vpop.f32.mrb[0].mxu0
    %534 = vdwg.mxu0
    %v535 = vmax.f32 %v532, 0.0
    %v536 = vld [vmem:[#allocation11] sm:$0xff]
    %v537 = vld [vmem:[#allocation11 + $0x8] sm:$0xff]
    %v538 = vld [vmem:[#allocation11 + $0x10] sm:$0xff]
    %v539 = vld [vmem:[#allocation11 + $0x18] sm:$0xff]
    %v540 = vld [vmem:[#allocation11 + $0x20] sm:$0xff]
    %v541 = vld [vmem:[#allocation11 + $0x28] sm:$0xff]
    %v542 = vld [vmem:[#allocation11 + $0x30] sm:$0xff]
    %v543 = vld [vmem:[#allocation11 + $0x38] sm:$0xff]
    %v544 = vld [vmem:[#allocation11 + $0x40] sm:$0xff]
    %v545 = vld [vmem:[#allocation11 + $0x48] sm:$0xff]
    %v546 = vld [vmem:[#allocation11 + $0x50] sm:$0xff]
    %v547 = vld [vmem:[#allocation11 + $0x58] sm:$0xff]
    %v548 = vld [vmem:[#allocation11 + $0x60] sm:$0xff]
    %v549 = vld [vmem:[#allocation11 + $0x68] sm:$0xff]
    %v550 = vld [vmem:[#allocation11 + $0x70] sm:$0xff]
    %v551 = vld [vmem:[#allocation11 + $0x78] sm:$0xff]
    %v552 = vld [vmem:[%s10] sm:$0x1]
    %v554 = vlaneseq
    %v555 = vshrl.u32 %v554, 7
    %v556 = vsub.s32 0, %v555
    %v557 = vrot.slane %v552, %v556
    %559 = vmatprep.subr.mxu0 0.0
    %560 = vmatpush1.msra.mxu0 %v536
    %561 = vmatprep.subr.mxu0 0.0
    %562 = vmatpush1.msra.mxu0 %v537
    %563 = vmatprep.subr.mxu0 0.0
    %564 = vmatpush1.msra.mxu0 %v538
    %565 = vmatprep.subr.mxu0 0.0
    %566 = vmatpush1.msra.mxu0 %v539
    %567 = vmatprep.subr.mxu0 0.0
    %568 = vmatpush1.msra.mxu0 %v540
    %569 = vmatprep.subr.mxu0 0.0
    %570 = vmatpush1.msra.mxu0 %v541
    %571 = vmatprep.subr.mxu0 0.0
    %572 = vmatpush1.msra.mxu0 %v542
    %573 = vmatprep.subr.mxu0 0.0
    %574 = vmatpush1.msra.mxu0 %v543
    %575 = vmatprep.subr.mxu0 0.0
    %576 = vmatpush1.msra.mxu0 %v544
    %577 = vmatprep.subr.mxu0 0.0
    %578 = vmatpush1.msra.mxu0 %v545
    %579 = vmatprep.subr.mxu0 0.0
    %580 = vmatpush1.msra.mxu0 %v546
    %581 = vmatprep.subr.mxu0 0.0
    %582 = vmatpush1.msra.mxu0 %v547
    %583 = vmatprep.subr.mxu0 0.0
    %584 = vmatpush1.msra.mxu0 %v548
    %585 = vmatprep.subr.mxu0 0.0
    %586 = vmatpush1.msra.mxu0 %v549
    %587 = vmatprep.subr.mxu0 0.0
    %588 = vmatpush1.msra.mxu0 %v550
    %589 = vmatprep.subr.mxu0 0.0
    %590 = vmatpush1.msra.mxu0 %v551
    %591 = vmatprep.subr.mxu0 0.0
    %592 = vmatpush1.msra.mxu0 0.0
    %593 = vmatprep.subr.mxu0 0.0
    %594 = vmatpush1.msra.mxu0 0.0
    %595 = vmatprep.subr.mxu0 0.0
    %596 = vmatpush1.msra.mxu0 0.0
    %597 = vmatprep.subr.mxu0 0.0
    %598 = vmatpush1.msra.mxu0 0.0
    %599 = vmatprep.subr.mxu0 0.0
    %600 = vmatpush1.msra.mxu0 0.0
    %601 = vmatprep.subr.mxu0 0.0
    %602 = vmatpush1.msra.mxu0 0.0
    %603 = vmatprep.subr.mxu0 0.0
    %604 = vmatpush1.msra.mxu0 0.0
    %605 = vmatprep.subr.mxu0 0.0
    %606 = vmatpush1.msra.mxu0 0.0
    %607 = vmatprep.subr.mxu0 0.0
    %608 = vmatpush1.msra.mxu0 0.0
    %609 = vmatprep.subr.mxu0 0.0
    %610 = vmatpush1.msra.mxu0 0.0
    %611 = vmatprep.subr.mxu0 0.0
    %612 = vmatpush1.msra.mxu0 0.0
    %613 = vmatprep.subr.mxu0 0.0
    %614 = vmatpush1.msra.mxu0 0.0
    %615 = vmatprep.subr.mxu0 0.0
    %616 = vmatpush1.msra.mxu0 0.0
    %617 = vmatprep.subr.mxu0 0.0
    %618 = vmatpush1.msra.mxu0 0.0
    %619 = vmatprep.subr.mxu0 0.0
    %620 = vmatpush1.msra.mxu0 0.0
    %621 = vmatprep.subr.mxu0 0.0
    %622 = vmatpush1.msra.mxu0 0.0
    %623 = vmatprep.mubr.f32.mxu0 0.0
    %624 = vmatmul.mubr.f32.gmra.mrb[0].mxu0 %v535
    %v625 = vpop.f32.mrb[0].mxu0
    %v626 = vadd.f32 %v557, %v625
    %v627 = vpop.f32.mrb[0].mxu0
    %628 = vdwg.mxu0
    %v629 = vmax.f32 %v626, 0.0
    %v630 = vld [vmem:[%s11] sm:$0x1]
    %v632 = vlaneseq
    %v633 = vshrl.u32 %v632, 7
    %v634 = vsub.s32 0, %v633
    %v635 = vrot.slane %v630, %v634
    %v637 = vmul.f32 %v629, %v635
    %638 = vadd.xlane.f32.xlu0 %v637
    %v639 = vpop.xlane.xlu0 %638
    %v640 = vld [vmem:[#allocation2] sm:$0x1]
    %v642 = vlaneseq
    %v643 = vshrl.u32 %v642, 7
    %v644 = vsub.s32 0, %v643
    %v645 = vrot.slane %v640, %v644
    %v647 = vadd.f32 %v639, %v645
    %vm648 = vcmask 7168
    %649 = vst.msk [vmem:[%s13] sm:$0xff] %vm648, %v647
    // Predicated region
    $region78: #{tpu_custom_call.1} parent=1 // pred_check
      _
    $region79: #{tpu_custom_call.1} parent=1 // pred_check_branch
      %651 = sbr.rel (0) target = $region81
    $region80: #{tpu_custom_call.1} parent=1 // pred_region
      _
    $region81: #{tpu_custom_call.1} parent=1 // pred_fallthru
      _
    // Predicated region
    $region82: #{tpu_custom_call.1} parent=1 // pred_check
      _
    $region83: #{tpu_custom_call.1} parent=1 // pred_check_branch
      %653 = sbr.rel (0) target = $region85
    $region84: #{tpu_custom_call.1} parent=1 // pred_region
      _
    $region85: #{tpu_custom_call.1} parent=1 // pred_fallthru
      _
    %654 = vsyncpa [#allocation4], 1
    %655 = vsyncpa [#allocation6], 1
    %656 = vsyncpa [#allocation9], 1
    %657 = vsyncpa [#allocation12], 1

</llo_original>
